<compile_context>
chip_gen: v7x
topology: tpu7x:2x2x1
jax: 0.10.0
libtpu: 0.0.40
codegen_flags: <defaults>
</compile_context>

<pallas_src>
import jax
import jax.numpy as jnp
from jax.experimental import pallas as pl
from jax.experimental.pallas import tpu as pltpu


_LANES = 1024           # lane-dense last dim (multiple of 128)
_SMALL_ROW_LIMIT = 512  # <= 512*1024*4B = 2 MiB f32 per input -> fast path
_TILE_ROWS = 256        # 256 x 1024 x 4B = 1 MiB per f32 tile per input
_NUM_SPLITS_LARGE = 2   # leading "parallel" axis -> both TCs on v7x


def _round_up(x, m):
    return (x + m - 1) // m * m


def _make_kernel(tile_rows, lanes, steps):
    last_step = steps - 1

    def kernel(xr_ref, x_ref, mu_ref, lv_ref, out_ref, acc_ref):
        c = pl.program_id(0)  # split index ("parallel")
        i = pl.program_id(1)  # streaming index ("arbitrary" reduction axis)

        @pl.when(i == 0)
        def _init():
            acc_ref[...] = jnp.zeros_like(acc_ref)

        # Streaming squared-error accumulation. Row-reduce the
        # (tile_rows, lanes) tile onto an (8, lanes) accumulator: pure VPU
        # adds every step, no per-step cross-lane (XLU) reduction.
        diff = xr_ref[...].astype(jnp.float32) - x_ref[...].astype(jnp.float32)
        sq = diff * diff
        acc_ref[...] += sq.reshape(tile_rows // 8, 8, lanes).sum(axis=0)

        @pl.when(i == last_step)
        def _finalize():
            partial = jnp.sum(acc_ref[...])  # single cross-lane reduce / split
            out_ref[...] = jnp.full(out_ref.shape, partial, dtype=jnp.float32)

        # KL divergence term, computed exactly once (tiny resident blocks).
        @pl.when((i == last_step) & (c == 0))
        def _kld():
            mu = mu_ref[...].astype(jnp.float32)
            lv = lv_ref[...].astype(jnp.float32)
            kld = -0.5 * jnp.sum(1.0 + lv - mu * mu - jnp.exp(lv))
            out_ref[...] = out_ref[...] + kld

    return kernel


def custom_loss(x_recon, x, mu, logvar):
    """Pallas TPU implementation of customLoss(reduction='sum', verbose=False)."""
    assert x_recon.shape == x.shape
    assert mu.shape == logvar.shape

    total = int(x.size)
    rows = pl.cdiv(total, _LANES)

    # Shape-based dispatch: single-step fast path for small inputs, tiled /
    # double-buffered / two-split streaming path for large inputs.
    if rows <= _SMALL_ROW_LIMIT:
        num_splits = 1
        tile_rows = _round_up(max(rows, 8), 8)
        steps = 1
    else:
        num_splits = _NUM_SPLITS_LARGE
        tile_rows = _TILE_ROWS
        steps = pl.cdiv(rows, tile_rows * num_splits)
    rows_padded = tile_rows * steps * num_splits

    def _prep(a):
        flat = a.reshape(-1)
        pad = rows_padded * _LANES - flat.shape[0]
        if pad:
            flat = jnp.pad(flat, (0, pad))  # zeros contribute 0 to the MSE sum
        return flat.reshape(rows_padded, _LANES)

    xr2 = _prep(x_recon)
    x2 = _prep(x)
    mu2 = mu.reshape(mu.shape[0], -1)
    lv2 = logvar.reshape(logvar.shape[0], -1)

    itemsize = jnp.dtype(x.dtype).itemsize
    cost = pl.CostEstimate(
        flops=3 * total + 5 * int(mu.size),
        transcendentals=int(mu.size),
        bytes_accessed=2 * total * itemsize + 2 * int(mu.size) * 4
        + num_splits * 8 * 128 * 4,
    )

    grid_spec = pltpu.PrefetchScalarGridSpec(
        num_scalar_prefetch=0,
        grid=(num_splits, steps),
        in_specs=[
            pl.BlockSpec((tile_rows, _LANES), lambda c, i: (c * steps + i, 0)),
            pl.BlockSpec((tile_rows, _LANES), lambda c, i: (c * steps + i, 0)),
            pl.BlockSpec(mu2.shape, lambda c, i: (0, 0)),
            pl.BlockSpec(lv2.shape, lambda c, i: (0, 0)),
        ],
        out_specs=pl.BlockSpec((8, 128), lambda c, i: (c, 0)),
        scratch_shapes=[pltpu.VMEM((8, _LANES), jnp.float32)],
    )

    out = pl.pallas_call(
        _make_kernel(tile_rows, _LANES, steps),
        out_shape=jax.ShapeDtypeStruct((num_splits * 8, 128), jnp.float32),
        grid_spec=grid_spec,
        compiler_params=pltpu.CompilerParams(
            dimension_semantics=("parallel", "arbitrary"),
            vmem_limit_bytes=32 * 1024 * 1024,
        ),
        cost_estimate=cost,
    )(xr2, x2, mu2, lv2)

    # One partial per split (value broadcast across its (8,128) block).
    partials = out.reshape(num_splits, 8, 128)[:, 0, 0]
    return jnp.sum(partials)


def _reference_loss(x_recon, x, mu, logvar):
    mse = jnp.sum((x_recon.astype(jnp.float32) - x.astype(jnp.float32)) ** 2)
    kld = -0.5 * jnp.sum(1.0 + logvar - mu ** 2 - jnp.exp(logvar))
    return mse + kld


if __name__ == "__main__":
    key = jax.random.PRNGKey(0)
    k1, k2, k3, k4 = jax.random.split(key, 4)

    # Small shapes consistent with a VAE forward: batch=2, channels=4,
    # spatial=16x16, latent dim=32.  -> exercises the single-step fast path.
    x_recon = jax.random.normal(k1, (2, 4, 16, 16), dtype=jnp.float32)
    x = jax.random.normal(k2, (2, 4, 16, 16), dtype=jnp.float32)
    mu = jax.random.normal(k3, (2, 32), dtype=jnp.float32)
    logvar = 0.1 * jax.random.normal(k4, (2, 32), dtype=jnp.float32)

    loss = custom_loss(x_recon, x, mu, logvar)
    jax.block_until_ready(loss)
    ref = _reference_loss(x_recon, x, mu, logvar)
    assert jnp.allclose(loss, ref, rtol=1e-5, atol=1e-4), (loss, ref)

    # Medium shape to exercise the tiled / two-split streaming path
    # (grid = (2, steps), 1 MiB tiles, VMEM partial-sum accumulator).
    xb_recon = jax.random.normal(k1, (16, 4, 128, 128), dtype=jnp.float32)
    xb = jax.random.normal(k2, (16, 4, 128, 128), dtype=jnp.float32)
    loss_b = custom_loss(xb_recon, xb, mu, logvar)
    jax.block_until_ready(loss_b)
    ref_b = _reference_loss(xb_recon, xb, mu, logvar)
    # Tiled f32 summation order differs from the monolithic reference sum.
    assert jnp.allclose(loss_b, ref_b, rtol=1e-5, atol=1e-2), (loss_b, ref_b)

    print("KERNEL_OK")
</pallas_src>

<mosaic_0001>
module attributes {stable_mosaic.version = 11 : i64} {
  func.func @kernel(%arg0: i32, %arg1: i32, %arg2: memref<8x1024xf32, #tpu.memory_space<vmem>>, %arg3: memref<8x1024xf32, #tpu.memory_space<vmem>>, %arg4: memref<2x32xf32, #tpu.memory_space<vmem>>, %arg5: memref<2x32xf32, #tpu.memory_space<vmem>>, %arg6: memref<8x128xf32, #tpu.memory_space<vmem>>, %arg7: memref<8x1024xf32, #tpu.memory_space<vmem>>) attributes {dimension_semantics = [#tpu.dimension_semantics<parallel>, #tpu.dimension_semantics<arbitrary>], iteration_bounds = array<i64: 1, 1>, scalar_prefetch = 0 : i64, scratch_operands = 1 : i64, tpu.core_type = #tpu.core_type<tc>, window_params = [{transform_indices = @transform_0, window_bounds = array<i64: 8, 1024>}, {transform_indices = @transform_1, window_bounds = array<i64: 8, 1024>}, {pipeline_mode = #tpu.pipeline_mode<synchronous>, transform_indices = @transform_2, window_bounds = array<i64: 2, 32>}, {pipeline_mode = #tpu.pipeline_mode<synchronous>, transform_indices = @transform_3, window_bounds = array<i64: 2, 32>}, {transform_indices = @transform_4, window_bounds = array<i64: 8, 128>}]} {
    %c0_i32 = arith.constant 0 : i32
    %0 = arith.cmpi eq, %arg1, %c0_i32 : i32
    %1 = arith.extui %0 : i1 to i32
    %c0_i32_0 = arith.constant 0 : i32
    %2 = arith.cmpi ne, %1, %c0_i32_0 : i32
    scf.if %2 {
      %cst_13 = arith.constant 0.000000e+00 : f32
      %20 = vector.broadcast %cst_13 : f32 to vector<8x1024xf32>
      %c0_14 = arith.constant 0 : index
      %c0_15 = arith.constant 0 : index
      %21 = vector.load %arg7[%c0_14, %c0_15] : memref<8x1024xf32, #tpu.memory_space<vmem>>, vector<8x1024xf32>
      tpu.vector_store %arg7[%c0_14, %c0_15], %20 {strides = array<i32>} : memref<8x1024xf32, #tpu.memory_space<vmem>>, vector<8x1024xf32>,
    } else {
    }
    %c0 = arith.constant 0 : index
    %c0_1 = arith.constant 0 : index
    %3 = vector.load %arg2[%c0, %c0_1] : memref<8x1024xf32, #tpu.memory_space<vmem>>, vector<8x1024xf32>
    %c0_2 = arith.constant 0 : index
    %c0_3 = arith.constant 0 : index
    %4 = vector.load %arg3[%c0_2, %c0_3] : memref<8x1024xf32, #tpu.memory_space<vmem>>, vector<8x1024xf32>
    %5 = arith.subf %3, %4 : vector<8x1024xf32>
    %6 = arith.mulf %5, %5 : vector<8x1024xf32>
    %c0_4 = arith.constant 0 : index
    %c0_5 = arith.constant 0 : index
    %7 = vector.load %arg7[%c0_4, %c0_5] : memref<8x1024xf32, #tpu.memory_space<vmem>>, vector<8x1024xf32>
    %8 = vector.shape_cast %6 : vector<8x1024xf32> to vector<1x8x1024xf32>
    %cst = arith.constant dense<0.000000e+00> : vector<8x1024xf32>
    %9 = vector.multi_reduction <add>, %8, %cst [0] : vector<1x8x1024xf32> to vector<8x1024xf32>
    %10 = arith.addf %7, %9 : vector<8x1024xf32>
    %c0_6 = arith.constant 0 : index
    %c0_7 = arith.constant 0 : index
    %11 = vector.load %arg7[%c0_6, %c0_7] : memref<8x1024xf32, #tpu.memory_space<vmem>>, vector<8x1024xf32>
    tpu.vector_store %arg7[%c0_6, %c0_7], %10 {strides = array<i32>} : memref<8x1024xf32, #tpu.memory_space<vmem>>, vector<8x1024xf32>,
    %c0_i32_8 = arith.constant 0 : i32
    %12 = arith.cmpi eq, %arg1, %c0_i32_8 : i32
    %13 = arith.extui %12 : i1 to i32
    %c0_i32_9 = arith.constant 0 : i32
    %14 = arith.cmpi ne, %13, %c0_i32_9 : i32
    scf.if %14 {
      %c0_13 = arith.constant 0 : index
      %c0_14 = arith.constant 0 : index
      %20 = vector.load %arg7[%c0_13, %c0_14] : memref<8x1024xf32, #tpu.memory_space<vmem>>, vector<8x1024xf32>
      %21 = vector.shape_cast %20 : vector<8x1024xf32> to vector<1x8x1024xf32>
      %cst_15 = arith.constant dense<0.000000e+00> : vector<1xf32>
      %22 = vector.multi_reduction <add>, %21, %cst_15 [1, 2] : vector<1x8x1024xf32> to vector<1xf32>
      %23 = vector.shape_cast %22 : vector<1xf32> to vector<1x1x1xf32>
      %24 = vector.extract %23[0, 0, 0] : f32 from vector<1x1x1xf32>
      %25 = vector.broadcast %24 : f32 to vector<8x128xf32>
      %c0_16 = arith.constant 0 : index
      %c0_17 = arith.constant 0 : index
      %26 = vector.load %arg6[%c0_16, %c0_17] : memref<8x128xf32, #tpu.memory_space<vmem>>, vector<8x128xf32>
      tpu.vector_store %arg6[%c0_16, %c0_17], %25 {strides = array<i32>} : memref<8x128xf32, #tpu.memory_space<vmem>>, vector<8x128xf32>,
    } else {
    }
    %c0_i32_10 = arith.constant 0 : i32
    %15 = arith.cmpi eq, %arg1, %c0_i32_10 : i32
    %c0_i32_11 = arith.constant 0 : i32
    %16 = arith.cmpi eq, %arg0, %c0_i32_11 : i32
    %17 = arith.andi %15, %16 : i1
    %18 = arith.extui %17 : i1 to i32
    %c0_i32_12 = arith.constant 0 : i32
    %19 = arith.cmpi ne, %18, %c0_i32_12 : i32
    scf.if %19 {
      %c0_13 = arith.constant 0 : index
      %c0_14 = arith.constant 0 : index
      %20 = vector.load %arg4[%c0_13, %c0_14] : memref<2x32xf32, #tpu.memory_space<vmem>>, vector<2x32xf32>
      %c0_15 = arith.constant 0 : index
      %c0_16 = arith.constant 0 : index
      %21 = vector.load %arg5[%c0_15, %c0_16] : memref<2x32xf32, #tpu.memory_space<vmem>>, vector<2x32xf32>
      %cst_17 = arith.constant 1.000000e+00 : f32
      %22 = vector.broadcast %cst_17 : f32 to vector<2x32xf32>
      %23 = arith.addf %22, %21 : vector<2x32xf32>
      %24 = arith.mulf %20, %20 : vector<2x32xf32>
      %25 = arith.subf %23, %24 : vector<2x32xf32>
      %26 = math.exp %21 : vector<2x32xf32>
      %27 = arith.subf %25, %26 : vector<2x32xf32>
      %28 = vector.shape_cast %27 : vector<2x32xf32> to vector<1x2x32xf32>
      %cst_18 = arith.constant dense<0.000000e+00> : vector<1xf32>
      %29 = vector.multi_reduction <add>, %28, %cst_18 [1, 2] : vector<1x2x32xf32> to vector<1xf32>
      %30 = vector.shape_cast %29 : vector<1xf32> to vector<1x1x1xf32>
      %31 = vector.extract %30[0, 0, 0] : f32 from vector<1x1x1xf32>
      %cst_19 = arith.constant -5.000000e-01 : f32
      %32 = arith.mulf %cst_19, %31 : f32
      %c0_20 = arith.constant 0 : index
      %c0_21 = arith.constant 0 : index
      %33 = vector.load %arg6[%c0_20, %c0_21] : memref<8x128xf32, #tpu.memory_space<vmem>>, vector<8x128xf32>
      %34 = vector.broadcast %32 : f32 to vector<8x128xf32>
      %35 = arith.addf %33, %34 : vector<8x128xf32>
      %c0_22 = arith.constant 0 : index
      %c0_23 = arith.constant 0 : index
      %36 = vector.load %arg6[%c0_22, %c0_23] : memref<8x128xf32, #tpu.memory_space<vmem>>, vector<8x128xf32>
      tpu.vector_store %arg6[%c0_22, %c0_23], %35 {strides = array<i32>} : memref<8x128xf32, #tpu.memory_space<vmem>>, vector<8x128xf32>,
    } else {
    }
    return
  }
  func.func @transform_0(%arg0: i32, %arg1: i32) -> (i32, i32) {
    %c1_i32 = arith.constant 1 : i32
    %0 = arith.muli %arg0, %c1_i32 : i32
    %1 = arith.addi %0, %arg1 : i32
    %c0_i32 = arith.constant 0 : i32
    %c0_i32_0 = arith.constant 0 : i32
    return %1, %c0_i32 : i32, i32
  }
  func.func @transform_1(%arg0: i32, %arg1: i32) -> (i32, i32) {
    %c1_i32 = arith.constant 1 : i32
    %0 = arith.muli %arg0, %c1_i32 : i32
    %1 = arith.addi %0, %arg1 : i32
    %c0_i32 = arith.constant 0 : i32
    %c0_i32_0 = arith.constant 0 : i32
    return %1, %c0_i32 : i32, i32
  }
  func.func @transform_2(%arg0: i32, %arg1: i32) -> (i32, i32) {
    %c0_i32 = arith.constant 0 : i32
    %c0_i32_0 = arith.constant 0 : i32
    %c0_i32_1 = arith.constant 0 : i32
    return %c0_i32, %c0_i32_0 : i32, i32
  }
  func.func @transform_3(%arg0: i32, %arg1: i32) -> (i32, i32) {
    %c0_i32 = arith.constant 0 : i32
    %c0_i32_0 = arith.constant 0 : i32
    %c0_i32_1 = arith.constant 0 : i32
    return %c0_i32, %c0_i32_0 : i32, i32
  }
  func.func @transform_4(%arg0: i32, %arg1: i32) -> (i32, i32) {
    %c0_i32 = arith.constant 0 : i32
    %c0_i32_0 = arith.constant 0 : i32
    return %arg0, %c0_i32 : i32, i32
  }
}

</mosaic_0001>

<llo_original>
// kernel: tpu_custom_call.1
$region0: #{tpu_custom_call.1}
  #allocation0 [shape = 'u32[]', space=smem, size = 0x4, offset = 0x4, fixed_abs, tag = 'smem constant byte address 0x4 - core index']
  #allocation1 [shape = 'u32[144,128]{1,0:T(1,128)}', space=vmem, size = 0x12000, scoped, tag = 'internal scratch']
  #allocation2 [shape = 'f32[8,1024]{1,0:T(8,128)}', space=vmem, size = 0x8000, scoped, tag = 'scratch operand']
  %s0 = inlined_call_operand.hbm [shape: f32[8,1024], index: 0, kind: input, shape index: {}]
  %s1 = inlined_call_operand.hbm [shape: f32[8,1024], index: 1, kind: input, shape index: {}]
  %s2 = inlined_call_operand.vmem [shape: f32[2,32], index: 2, kind: input, shape index: {}]
  %s3 = inlined_call_operand.vmem [shape: f32[2,32], index: 3, kind: input, shape index: {}]
  %s4 = inlined_call_operand.hbm [shape: f32[8,128], index: 4, kind: output, shape index: {}]
  %s5 = sld [smem:[#allocation0]]
  $region46: #{tpu_custom_call.1} parent=0
    _
  %s7 = ssub.s32 1, %s5
  %s8 = scalar_select 0, %s7, %s5
  $region1: #{tpu_custom_call.1} parent=0
    #allocation3 [shape = 'u8[32768]{0}', space=vmem, size = 0x8000, scoped, tag = 'input window, operand 0, single buffered']
    #allocation4 [shape = 's32[1]{0}', space=sflag, size = 0x4, scoped, tag = 'scoped memory for tpu_custom_call.1']
    #allocation5 [shape = 's32[1]{0}', space=sflag, size = 0x4, scoped, tag = 'scoped memory for tpu_custom_call.1']
    #allocation6 [shape = 'u8[32768]{0}', space=vmem, size = 0x8000, scoped, tag = 'input window, operand 1, single buffered']
    #allocation7 [shape = 's32[1]{0}', space=sflag, size = 0x4, scoped, tag = 'scoped memory for tpu_custom_call.1']
    #allocation8 [shape = 'u8[4096]{0}', space=vmem, size = 0x1000, scoped, tag = 'output window, operand 0, single buffered']
    %9 = vsyncpa [#allocation4], 0
    %10 = vsyncpa [#allocation7], 0
    %11 = vsyncpa [#allocation5], 0
    // Predicated region
    $region2: #{tpu_custom_call.1} parent=1 // pred_check
      _
    $region3: #{tpu_custom_call.1} parent=1 // pred_check_branch
      %13 = sbr.rel (0) target = $region5
    $region4: #{tpu_custom_call.1} parent=1 // pred_region
      %s14 = sadd.s32 0, 0
      %s16 = ssub.s32 1024, 1024
      %17 = vsyncadd [#allocation4], %s16
      %s18 = smul.addr %s14, 8
      %s19 = smul.addr %s18, 128
      %s20 = scalar_lea.hbm %s0, %s19
      %s22 = sshll.u32 [#allocation3], 4
      %s23 = int_to_ptr.vmem [resolvable:$true] %s22
      %25 = dma.hbm_to_vmem [thread:$0]  %s20, 1024, %s23, [#allocation4]
    $region5: #{tpu_custom_call.1} parent=1 // pred_fallthru
      _
    // Predicated region
    $region6: #{tpu_custom_call.1} parent=1 // pred_check
      _
    $region7: #{tpu_custom_call.1} parent=1 // pred_check_branch
      %27 = sbr.rel (0) target = $region9
    $region8: #{tpu_custom_call.1} parent=1 // pred_region
      %s28 = sadd.s32 0, 0
      %s30 = ssub.s32 1024, 1024
      %31 = vsyncadd [#allocation7], %s30
      %s32 = smul.addr %s28, 8
      %s33 = smul.addr %s32, 128
      %s34 = scalar_lea.hbm %s1, %s33
      %s36 = sshll.u32 [#allocation6], 4
      %s37 = int_to_ptr.vmem [resolvable:$true] %s36
      %39 = dma.hbm_to_vmem [thread:$0]  %s34, 1024, %s37, [#allocation7]
    $region9: #{tpu_custom_call.1} parent=1 // pred_fallthru
      _
    // Predicated region
    $region10: #{tpu_custom_call.1} parent=1 // pred_check
      _
    $region11: #{tpu_custom_call.1} parent=1 // pred_check_branch
      %41 = sbr.rel (0) target = $region13
    $region12: #{tpu_custom_call.1} parent=1 // pred_region
      _
    $region13: #{tpu_custom_call.1} parent=1 // pred_fallthru
      _
    // Predicated region
    $region14: #{tpu_custom_call.1} parent=1 // pred_check
      _
    $region15: #{tpu_custom_call.1} parent=1 // pred_check_branch
      %43 = sbr.rel (0) target = $region17
    $region16: #{tpu_custom_call.1} parent=1 // pred_region
      _
    $region17: #{tpu_custom_call.1} parent=1 // pred_fallthru
      _
    // Predicated region
    $region18: #{tpu_custom_call.1} parent=1 // pred_check
      _
    $region19: #{tpu_custom_call.1} parent=1 // pred_check_branch
      %45 = sbr.rel (0) target = $region21
    $region20: #{tpu_custom_call.1} parent=1 // pred_region
      %46 = dma.done [#allocation4], 1024
    $region21: #{tpu_custom_call.1} parent=1 // pred_fallthru
      _
    // Predicated region
    $region22: #{tpu_custom_call.1} parent=1 // pred_check
      _
    $region23: #{tpu_custom_call.1} parent=1 // pred_check_branch
      %48 = sbr.rel (0) target = $region25
    $region24: #{tpu_custom_call.1} parent=1 // pred_region
      %49 = dma.done [#allocation7], 1024
    $region25: #{tpu_custom_call.1} parent=1 // pred_fallthru
      _
    %s50 = sadd.s32 0, 0
    %s51 = sadd.s32 0, 0
    %p52 = scmp.eq.s32.totalorder 0, 0
    // Predicated region
    $region26: #{tpu_custom_call.1} parent=1 // pred_check
      %p53 = pneg %p52
    $region27: #{tpu_custom_call.1} parent=1 // pred_check_branch
      %55 = sbr.rel (%p53) target = $region29
    $region28: #{tpu_custom_call.1} parent=1 // pred_region
      %56 = vst [vmem:[#allocation2] sm:$0xff] 0.0
      %57 = vst [vmem:[#allocation2 + $0x8] sm:$0xff] 0.0
      %58 = vst [vmem:[#allocation2 + $0x10] sm:$0xff] 0.0
      %59 = vst [vmem:[#allocation2 + $0x18] sm:$0xff] 0.0
      %60 = vst [vmem:[#allocation2 + $0x20] sm:$0xff] 0.0
      %61 = vst [vmem:[#allocation2 + $0x28] sm:$0xff] 0.0
      %62 = vst [vmem:[#allocation2 + $0x30] sm:$0xff] 0.0
      %63 = vst [vmem:[#allocation2 + $0x38] sm:$0xff] 0.0
    $region29: #{tpu_custom_call.1} parent=1 // pred_fallthru
      _
    %v64 = vld [vmem:[#allocation3] sm:$0xff]
    %v65 = vld [vmem:[#allocation3 + $0x8] sm:$0xff]
    %v66 = vld [vmem:[#allocation3 + $0x10] sm:$0xff]
    %v67 = vld [vmem:[#allocation3 + $0x18] sm:$0xff]
    %v68 = vld [vmem:[#allocation3 + $0x20] sm:$0xff]
    %v69 = vld [vmem:[#allocation3 + $0x28] sm:$0xff]
    %v70 = vld [vmem:[#allocation3 + $0x30] sm:$0xff]
    %v71 = vld [vmem:[#allocation3 + $0x38] sm:$0xff]
    %v72 = vld [vmem:[#allocation6] sm:$0xff]
    %v73 = vld [vmem:[#allocation6 + $0x8] sm:$0xff]
    %v74 = vld [vmem:[#allocation6 + $0x10] sm:$0xff]
    %v75 = vld [vmem:[#allocation6 + $0x18] sm:$0xff]
    %v76 = vld [vmem:[#allocation6 + $0x20] sm:$0xff]
    %v77 = vld [vmem:[#allocation6 + $0x28] sm:$0xff]
    %v78 = vld [vmem:[#allocation6 + $0x30] sm:$0xff]
    %v79 = vld [vmem:[#allocation6 + $0x38] sm:$0xff]
    %v80 = vsub.f32 %v64, %v72
    %v81 = vsub.f32 %v65, %v73
    %v82 = vsub.f32 %v66, %v74
    %v83 = vsub.f32 %v67, %v75
    %v84 = vsub.f32 %v68, %v76
    %v85 = vsub.f32 %v69, %v77
    %v86 = vsub.f32 %v70, %v78
    %v87 = vsub.f32 %v71, %v79
    %v88 = vmul.f32 %v80, %v80
    %v89 = vmul.f32 %v81, %v81
    %v90 = vmul.f32 %v82, %v82
    %v91 = vmul.f32 %v83, %v83
    %v92 = vmul.f32 %v84, %v84
    %v93 = vmul.f32 %v85, %v85
    %v94 = vmul.f32 %v86, %v86
    %v95 = vmul.f32 %v87, %v87
    %v96 = vld [vmem:[#allocation2] sm:$0xff]
    %v97 = vld [vmem:[#allocation2 + $0x8] sm:$0xff]
    %v98 = vld [vmem:[#allocation2 + $0x10] sm:$0xff]
    %v99 = vld [vmem:[#allocation2 + $0x18] sm:$0xff]
    %v100 = vld [vmem:[#allocation2 + $0x20] sm:$0xff]
    %v101 = vld [vmem:[#allocation2 + $0x28] sm:$0xff]
    %v102 = vld [vmem:[#allocation2 + $0x30] sm:$0xff]
    %v103 = vld [vmem:[#allocation2 + $0x38] sm:$0xff]
    %v104 = vadd.f32 %v88, 0.0
    %v105 = vadd.f32 %v89, 0.0
    %v106 = vadd.f32 %v90, 0.0
    %v107 = vadd.f32 %v91, 0.0
    %v108 = vadd.f32 %v92, 0.0
    %v109 = vadd.f32 %v93, 0.0
    %v110 = vadd.f32 %v94, 0.0
    %v111 = vadd.f32 %v95, 0.0
    %v112 = vadd.f32 %v96, %v104
    %v113 = vadd.f32 %v97, %v105
    %v114 = vadd.f32 %v98, %v106
    %v115 = vadd.f32 %v99, %v107
    %v116 = vadd.f32 %v100, %v108
    %v117 = vadd.f32 %v101, %v109
    %v118 = vadd.f32 %v102, %v110
    %v119 = vadd.f32 %v103, %v111
    %120 = vst [vmem:[#allocation2] sm:$0xff] %v112
    %121 = vst [vmem:[#allocation2 + $0x8] sm:$0xff] %v113
    %122 = vst [vmem:[#allocation2 + $0x10] sm:$0xff] %v114
    %123 = vst [vmem:[#allocation2 + $0x18] sm:$0xff] %v115
    %124 = vst [vmem:[#allocation2 + $0x20] sm:$0xff] %v116
    %125 = vst [vmem:[#allocation2 + $0x28] sm:$0xff] %v117
    %126 = vst [vmem:[#allocation2 + $0x30] sm:$0xff] %v118
    %127 = vst [vmem:[#allocation2 + $0x38] sm:$0xff] %v119
    // Predicated region
    $region30: #{tpu_custom_call.1} parent=1 // pred_check
      %p128 = pneg %p52
    $region31: #{tpu_custom_call.1} parent=1 // pred_check_branch
      %130 = sbr.rel (%p128) target = $region33
    $region32: #{tpu_custom_call.1} parent=1 // pred_region
      %v131 = vld [vmem:[#allocation2] sm:$0xff]
      %v132 = vld [vmem:[#allocation2 + $0x8] sm:$0xff]
      %v133 = vld [vmem:[#allocation2 + $0x10] sm:$0xff]
      %v134 = vld [vmem:[#allocation2 + $0x18] sm:$0xff]
      %v135 = vld [vmem:[#allocation2 + $0x20] sm:$0xff]
      %v136 = vld [vmem:[#allocation2 + $0x28] sm:$0xff]
      %v137 = vld [vmem:[#allocation2 + $0x30] sm:$0xff]
      %v138 = vld [vmem:[#allocation2 + $0x38] sm:$0xff]
      %v139 = vadd.f32 %v131, %v132
      %v140 = vadd.f32 %v139, %v133
      %v141 = vadd.f32 %v140, %v134
      %v142 = vadd.f32 %v141, %v135
      %v143 = vadd.f32 %v142, %v136
      %v144 = vadd.f32 %v143, %v137
      %v145 = vadd.f32 %v144, %v138
      %146 = vadd.xlane.f32.xlu0 %v145
      %v147 = vpop.xlane.xlu0 %146
      %v148 = vrot.slane %v147, 4
      %v149 = vadd.f32 %v147, %v148
      %v150 = vrot.slane %v149, 2
      %v151 = vadd.f32 %v149, %v150
      %v152 = vrot.slane %v151, 1
      %v153 = vadd.f32 %v151, %v152
      %s154 = vtos %v153
      %v155 = vstv %s154
      %156 = vst [vmem:[#allocation8] sm:$0xff] %v155
    $region33: #{tpu_custom_call.1} parent=1 // pred_fallthru
      _
    %p157 = scmp.eq.s32.totalorder 0, 0
    %p158 = pnand %p52, %p157
    %p159 = pneg %p158
    // Predicated region
    $region34: #{tpu_custom_call.1} parent=1 // pred_check
      _
    $region35: #{tpu_custom_call.1} parent=1 // pred_check_branch
      %161 = sbr.rel (%p158) target = $region37
    $region36: #{tpu_custom_call.1} parent=1 // pred_region
      %v162 = vld [vmem:[%s2] sm:$0x3]
      %v163 = vld [vmem:[%s3] sm:$0x3]
      %v164 = vadd.f32 %v163, 1.0
      %v165 = vmul.f32 %v162, %v162
      %v166 = vsub.f32 %v164, %v165
      %v167 = vmul.f32 %v163, 1.442695
      %v168 = vpow.pop %v167
      %v169 = vsub.f32 %v166, %v168
      %vm170 = vcmask 254976
      %v171 = vsel %vm170, %v169, 0.0
      %172 = vadd.xlane.f32.xlu0 %v171
      %v173 = vpop.xlane.xlu0 %172
      %v174 = vrot.slane %v173, 4
      %v175 = vadd.f32 %v173, %v174
      %v176 = vrot.slane %v175, 2
      %v177 = vadd.f32 %v175, %v176
      %v178 = vrot.slane %v177, 1
      %v179 = vadd.f32 %v177, %v178
      %s180 = vtos %v179
      %s181 = smul.f32 %s180, -0.5
      %v182 = vld [vmem:[#allocation8] sm:$0xff]
      %v183 = vstv %s181
      %v184 = vadd.f32 %v182, %v183
      %185 = vst [vmem:[#allocation8] sm:$0xff] %v184
    $region37: #{tpu_custom_call.1} parent=1 // pred_fallthru
      _
    // Predicated region
    $region38: #{tpu_custom_call.1} parent=1 // pred_check
      _
    $region39: #{tpu_custom_call.1} parent=1 // pred_check_branch
      %187 = sbr.rel (0) target = $region41
    $region40: #{tpu_custom_call.1} parent=1 // pred_region
      %s189 = ssub.s32 128, 128
      %190 = vsyncadd [#allocation5], %s189
      %s192 = sshll.u32 [#allocation8], 4
      %s193 = int_to_ptr.vmem [resolvable:$true] %s192
      %195 = dma.vmem_to_hbm [thread:$0]  %s193, 128, %s4, [#allocation5]
    $region41: #{tpu_custom_call.1} parent=1 // pred_fallthru
      _
    // Predicated region
    $region42: #{tpu_custom_call.1} parent=1 // pred_check
      _
    $region43: #{tpu_custom_call.1} parent=1 // pred_check_branch
      %197 = sbr.rel (0) target = $region45
    $region44: #{tpu_custom_call.1} parent=1 // pred_region
      %198 = dma.done [#allocation5], 128
    $region45: #{tpu_custom_call.1} parent=1 // pred_fallthru
      _
    %199 = vsyncpa [#allocation4], 1
    %200 = vsyncpa [#allocation7], 1
    %201 = vsyncpa [#allocation5], 1

</llo_original>
